<compile_context>
chip_gen: v6e
topology: v6e:2x2x1
jax: 0.10.0
libtpu: 0.0.40
codegen_flags: <defaults>
</compile_context>

<pallas_src>
import functools

import jax
import jax.numpy as jnp
from jax.experimental import pallas as pl
from jax.experimental.pallas import tpu as pltpu


def _vmem_capacity_bytes():
    try:
        return int(pltpu.get_tpu_info().vmem_capacity_bytes)
    except Exception:
        return 64 * 1024 * 1024  # v7x-safe floor


def _round_up(x, m):
    return ((x + m - 1) // m) * m


def _choose_tiles(batch_heads, tgt_len, src_len, head_dim, itemsize, budget):
    """Pick (heads_per_block, tq) so one grid step's live set fits the VMEM budget."""

    def per_head_bytes(tq):
        scores = tq * src_len * 4                                   # single live f32 (TQ,S)
        io = (2 * tq * head_dim + 2 * src_len * head_dim) * itemsize  # q,out,k,v blocks
        w_out = tq * src_len * itemsize                              # weights tile
        return scores + 2 * (io + w_out)                             # 2x for double-buffering

    tq = tgt_len
    while per_head_bytes(tq) > budget and tq > 8:
        tq = max(8, _round_up(tq // 2, 8))          # keep (8,128) block divisibility

    hb = 1
    # Batch heads only in the tiny-tile regime (amortize ~0.35us/step overhead).
    while (hb * 2 <= batch_heads
           and batch_heads % (hb * 2) == 0
           and (hb * 2) * per_head_bytes(tq) <= budget
           and tq == tgt_len
           and tq * src_len <= 128 * 128):
        hb *= 2
    return hb, tq


def _sdp_kernel(q_ref, k_ref, v_ref, out_ref, w_ref, *, scale):
    # q_ref: (HB, TQ, D), k_ref/v_ref: (HB, S, D), out_ref: (HB, TQ, D), w_ref: (HB, TQ, S)
    # Scale q (TQxD, the small tensor) in its native dtype; matmuls keep native
    # operands and accumulate in f32 on the MXU.
    q = q_ref[...] * jnp.asarray(scale, dtype=q_ref.dtype)
    k = k_ref[...]
    v = v_ref[...]

    # scores = q @ k^T over the head dim, batched over heads -> (HB, TQ, S), f32 acc
    s = jnp.einsum("htd,hsd->hts", q, k, preferred_element_type=jnp.float32)

    # TODO(synk): attn_mask / bias_k / bias_v / dropout>0 paths not implemented
    # (module defaults: no mask, no bias, dropout=0.0).

    # Numerically-stable softmax; keep a single live (HB,TQ,S) f32 array.
    m = jnp.max(s, axis=-1, keepdims=True)
    s = jnp.exp(s - m)
    denom = jnp.sum(s, axis=-1, keepdims=True)
    s = s * pl.reciprocal(denom, approx=True)          # EUP vrcp (free slot)

    # Retire the weights tile early, then feed the MXU with value-dtype operands.
    w_ref[...] = s.astype(w_ref.dtype)
    out = jnp.einsum("hts,hsd->htd", s.astype(v_ref.dtype), v,
                     preferred_element_type=jnp.float32)
    out_ref[...] = out.astype(out_ref.dtype)


def scaled_dot_product(query, key, value, *, batch_first=False):
    """Pallas implementation of ScaledDotProduct.forward (no mask/bias, dropout=0)."""
    if batch_first:
        query = jnp.swapaxes(query, -3, -2)
        key = jnp.swapaxes(key, -3, -2)
        value = jnp.swapaxes(value, -3, -2)

    tgt_len, batch_heads, head_dim = query.shape
    src_len = key.shape[0]
    assert key.shape == value.shape
    assert query.shape[-1] == key.shape[-1] == value.shape[-1]
    assert key.shape[1] == batch_heads

    # Glue: seq-first (PyTorch API) -> head-first layout for the kernel.
    # Callers already holding a (BH, T, D) layout can call the pallas_call
    # directly and skip these HBM round-trips.
    q_bh = jnp.transpose(query, (1, 0, 2))   # (BH, T, D)
    k_bh = jnp.transpose(key, (1, 0, 2))     # (BH, S, D)
    v_bh = jnp.transpose(value, (1, 0, 2))   # (BH, S, D)

    vmem_cap = _vmem_capacity_bytes()
    vmem_limit = min(vmem_cap * 3 // 4, 96 * 1024 * 1024)
    hb, tq = _choose_tiles(batch_heads, tgt_len, src_len, head_dim,
                           jnp.dtype(query.dtype).itemsize, vmem_limit // 2)
    scale = float(head_dim) ** -0.5

    out_bh, weights = pl.pallas_call(
        functools.partial(_sdp_kernel, scale=scale),
        out_shape=(
            jax.ShapeDtypeStruct((batch_heads, tgt_len, head_dim), query.dtype),
            jax.ShapeDtypeStruct((batch_heads, tgt_len, src_len), query.dtype),
        ),
        grid_spec=pltpu.PrefetchScalarGridSpec(
            num_scalar_prefetch=0,
            grid=(batch_heads // hb, pl.cdiv(tgt_len, tq)),
            in_specs=[
                pl.BlockSpec((hb, tq, head_dim), lambda h, t: (h, t, 0)),
                pl.BlockSpec((hb, src_len, head_dim), lambda h, t: (h, 0, 0)),
                pl.BlockSpec((hb, src_len, head_dim), lambda h, t: (h, 0, 0)),
            ],
            out_specs=[
                pl.BlockSpec((hb, tq, head_dim), lambda h, t: (h, t, 0)),
                pl.BlockSpec((hb, tq, src_len), lambda h, t: (h, t, 0)),
            ],
        ),
        compiler_params=pltpu.CompilerParams(
            dimension_semantics=("parallel", "parallel"),
            vmem_limit_bytes=vmem_limit,
        ),
    )(q_bh, k_bh, v_bh)

    # attn_output back to seq-first: (BH, T, D) -> (T, BH, D)
    attn_output = jnp.transpose(out_bh, (1, 0, 2))
    if batch_first:
        attn_output = jnp.swapaxes(attn_output, -3, -2)
    return attn_output, weights


def _reference(query, key, value):
    # pure-JAX reference mirroring the PyTorch forward (no mask, dropout=0)
    head_dim = query.shape[-1]
    q = jnp.transpose(query, (1, 0, 2)) * (float(head_dim) ** -0.5)
    k = jnp.transpose(key, (1, 0, 2))
    v = jnp.transpose(value, (1, 0, 2))
    w = jax.nn.softmax(jnp.einsum("btd,bsd->bts", q, k), axis=-1)
    o = jnp.einsum("bts,bsd->btd", w, v)
    return jnp.transpose(o, (1, 0, 2)), w


if __name__ == "__main__":
    key0 = jax.random.PRNGKey(0)
    kq, kk, kv = jax.random.split(key0, 3)

    tgt_len, src_len, batch_heads, head_dim = 8, 8, 4, 32
    query = jax.random.normal(kq, (tgt_len, batch_heads, head_dim), jnp.float32)
    key_t = jax.random.normal(kk, (src_len, batch_heads, head_dim), jnp.float32)
    value = jax.random.normal(kv, (src_len, batch_heads, head_dim), jnp.float32)

    attn_out, attn_w = scaled_dot_product(query, key_t, value)
    attn_out = jax.block_until_ready(attn_out)
    attn_w = jax.block_until_ready(attn_w)

    ref_out, ref_w = _reference(query, key_t, value)
    assert attn_out.shape == (tgt_len, batch_heads, head_dim)
    assert attn_w.shape == (batch_heads, tgt_len, src_len)
    # approx reciprocal in the softmax -> slightly looser tolerances than pure f32
    assert jnp.allclose(attn_out, ref_out, atol=1e-2, rtol=1e-2)
    assert jnp.allclose(attn_w, ref_w, atol=1e-2, rtol=1e-2)

    print("KERNEL_OK")
</pallas_src>

<mosaic_0001>
module attributes {stable_mosaic.version = 11 : i64} {
  func.func @_sdp_kernel(%arg0: i32, %arg1: i32, %arg2: memref<4x8x32xf32, #tpu.memory_space<vmem>>, %arg3: memref<4x8x32xf32, #tpu.memory_space<vmem>>, %arg4: memref<4x8x32xf32, #tpu.memory_space<vmem>>, %arg5: memref<4x8x32xf32, #tpu.memory_space<vmem>>, %arg6: memref<4x8x8xf32, #tpu.memory_space<vmem>>) attributes {dimension_semantics = [#tpu.dimension_semantics<parallel>, #tpu.dimension_semantics<parallel>], iteration_bounds = array<i64: 1, 1>, scalar_prefetch = 0 : i64, scratch_operands = 0 : i64, tpu.core_type = #tpu.core_type<tc>, window_params = [{transform_indices = @transform_0, window_bounds = array<i64: 4, 8, 32>}, {transform_indices = @transform_1, window_bounds = array<i64: 4, 8, 32>}, {transform_indices = @transform_2, window_bounds = array<i64: 4, 8, 32>}, {transform_indices = @transform_3, window_bounds = array<i64: 4, 8, 32>}, {transform_indices = @transform_4, window_bounds = array<i64: 4, 8, 8>}]} {
    %c0 = arith.constant 0 : index
    %c0_0 = arith.constant 0 : index
    %c0_1 = arith.constant 0 : index
    %0 = vector.load %arg2[%c0, %c0_0, %c0_1] : memref<4x8x32xf32, #tpu.memory_space<vmem>>, vector<4x8x32xf32>
    %cst = arith.constant 0.176776692 : f32
    %1 = vector.broadcast %cst : f32 to vector<4x8x32xf32>
    %2 = arith.mulf %0, %1 : vector<4x8x32xf32>
    %c0_2 = arith.constant 0 : index
    %c0_3 = arith.constant 0 : index
    %c0_4 = arith.constant 0 : index
    %3 = vector.load %arg3[%c0_2, %c0_3, %c0_4] : memref<4x8x32xf32, #tpu.memory_space<vmem>>, vector<4x8x32xf32>
    %c0_5 = arith.constant 0 : index
    %c0_6 = arith.constant 0 : index
    %c0_7 = arith.constant 0 : index
    %4 = vector.load %arg4[%c0_5, %c0_6, %c0_7] : memref<4x8x32xf32, #tpu.memory_space<vmem>>, vector<4x8x32xf32>
    "tpu.trace_start"() <{level = 10 : i32, message = "htd,hsd->hts"}> : () -> ()
    %cst_8 = arith.constant dense<0.000000e+00> : vector<4x8x8xf32>
    %5 = tpu.matmul %2, %3, %cst_8 {dimension_numbers = #tpu.dot_dimension_numbers<[2], [2], [1], [1], [0, 0, 0, 1, 1, 1], [0], [0]>} : vector<4x8x32xf32>, vector<4x8x32xf32>, vector<4x8x8xf32> -> vector<4x8x8xf32>
    "tpu.trace_stop"() : () -> ()
    %cst_9 = arith.constant dense<0xFF800000> : vector<4x8xf32>
    %6 = vector.multi_reduction <maximumf>, %5, %cst_9 [2] : vector<4x8x8xf32> to vector<4x8xf32>
    %7 = vector.shape_cast %6 : vector<4x8xf32> to vector<4x8x1xf32>
    %8 = vector.broadcast %7 : vector<4x8x1xf32> to vector<4x8x8xf32>
    %9 = arith.subf %5, %8 : vector<4x8x8xf32>
    %10 = math.exp %9 : vector<4x8x8xf32>
    %cst_10 = arith.constant dense<0.000000e+00> : vector<4x8xf32>
    %11 = vector.multi_reduction <add>, %10, %cst_10 [2] : vector<4x8x8xf32> to vector<4x8xf32>
    %12 = vector.shape_cast %11 : vector<4x8xf32> to vector<4x8x1xf32>
    %13 = tpu.reciprocal %12 {approx = true} : vector<4x8x1xf32> -> vector<4x8x1xf32>
    %14 = vector.broadcast %13 : vector<4x8x1xf32> to vector<4x8x8xf32>
    %15 = arith.mulf %10, %14 : vector<4x8x8xf32>
    %c0_11 = arith.constant 0 : index
    %c0_12 = arith.constant 0 : index
    %c0_13 = arith.constant 0 : index
    %16 = vector.load %arg6[%c0_11, %c0_12, %c0_13] : memref<4x8x8xf32, #tpu.memory_space<vmem>>, vector<4x8x8xf32>
    tpu.vector_store %arg6[%c0_11, %c0_12, %c0_13], %15 {strides = array<i32>} : memref<4x8x8xf32, #tpu.memory_space<vmem>>, vector<4x8x8xf32>,
    "tpu.trace_start"() <{level = 10 : i32, message = "hts,hsd->htd"}> : () -> ()
    %cst_14 = arith.constant dense<0.000000e+00> : vector<4x8x32xf32>
    %17 = tpu.matmul %15, %4, %cst_14 {dimension_numbers = #tpu.dot_dimension_numbers<[2], [1], [1], [2], [0, 0, 0, 1, 1, 2], [0], [0]>} : vector<4x8x8xf32>, vector<4x8x32xf32>, vector<4x8x32xf32> -> vector<4x8x32xf32>
    "tpu.trace_stop"() : () -> ()
    %c0_15 = arith.constant 0 : index
    %c0_16 = arith.constant 0 : index
    %c0_17 = arith.constant 0 : index
    %18 = vector.load %arg5[%c0_15, %c0_16, %c0_17] : memref<4x8x32xf32, #tpu.memory_space<vmem>>, vector<4x8x32xf32>
    tpu.vector_store %arg5[%c0_15, %c0_16, %c0_17], %17 {strides = array<i32>} : memref<4x8x32xf32, #tpu.memory_space<vmem>>, vector<4x8x32xf32>,
    return
  }
  func.func @transform_0(%arg0: i32, %arg1: i32) -> (i32, i32, i32) {
    %c0_i32 = arith.constant 0 : i32
    %c0_i32_0 = arith.constant 0 : i32
    return %arg0, %arg1, %c0_i32 : i32, i32, i32
  }
  func.func @transform_1(%arg0: i32, %arg1: i32) -> (i32, i32, i32) {
    %c0_i32 = arith.constant 0 : i32
    %c0_i32_0 = arith.constant 0 : i32
    %c0_i32_1 = arith.constant 0 : i32
    return %arg0, %c0_i32, %c0_i32_0 : i32, i32, i32
  }
  func.func @transform_2(%arg0: i32, %arg1: i32) -> (i32, i32, i32) {
    %c0_i32 = arith.constant 0 : i32
    %c0_i32_0 = arith.constant 0 : i32
    %c0_i32_1 = arith.constant 0 : i32
    return %arg0, %c0_i32, %c0_i32_0 : i32, i32, i32
  }
  func.func @transform_3(%arg0: i32, %arg1: i32) -> (i32, i32, i32) {
    %c0_i32 = arith.constant 0 : i32
    %c0_i32_0 = arith.constant 0 : i32
    return %arg0, %arg1, %c0_i32 : i32, i32, i32
  }
  func.func @transform_4(%arg0: i32, %arg1: i32) -> (i32, i32, i32) {
    %c0_i32 = arith.constant 0 : i32
    %c0_i32_0 = arith.constant 0 : i32
    return %arg0, %arg1, %c0_i32 : i32, i32, i32
  }
}

</mosaic_0001>

<llo_original>
// kernel: tpu_custom_call.1
$region0: #{tpu_custom_call.1}
  #allocation0 [shape = 'u32[]', space=smem, size = 0x4, offset = 0x4, fixed_abs, tag = 'smem constant byte address 0x4 - core index']
  #allocation1 [shape = 'u32[144,128]{1,0:T(1,128)}', space=vmem, size = 0x12000, scoped, tag = 'internal scratch']
  %s0 = inlined_call_operand.hbm [shape: f32[4,8,32], index: 0, kind: input, shape index: {}]
  %s1 = inlined_call_operand.hbm [shape: f32[4,8,32], index: 1, kind: input, shape index: {}]
  %s2 = inlined_call_operand.hbm [shape: f32[4,8,32], index: 2, kind: input, shape index: {}]
  %s3 = inlined_call_operand.hbm [shape: f32[4,8,32], index: 3, kind: output, shape index: {0}]
  %s4 = inlined_call_operand.hbm [shape: f32[4,8,8], index: 4, kind: output, shape index: {1}]
  %5 = xla_tuple %s3, %s4
  %s6 = sld [smem:[#allocation0]]
  $region42: #{tpu_custom_call.1} parent=0
    _
  %s8 = ssub.s32 1, %s6
  %s9 = scalar_select 0, %s8, %s6
  $region1: #{tpu_custom_call.1} parent=0
    #allocation2 [shape = 'u8[16384]{0}', space=vmem, size = 0x4000, scoped, tag = 'input window, operand 0, single buffered']
    #allocation3 [shape = 's32[1]{0}', space=sflag, size = 0x4, scoped, tag = 'scoped memory for tpu_custom_call.1']
    #allocation4 [shape = 's32[1]{0}', space=sflag, size = 0x4, scoped, tag = 'scoped memory for tpu_custom_call.1']
    #allocation5 [shape = 'u8[16384]{0}', space=vmem, size = 0x4000, scoped, tag = 'input window, operand 1, single buffered']
    #allocation6 [shape = 's32[1]{0}', space=sflag, size = 0x4, scoped, tag = 'scoped memory for tpu_custom_call.1']
    #allocation7 [shape = 'u8[16384]{0}', space=vmem, size = 0x4000, scoped, tag = 'input window, operand 2, single buffered']
    #allocation8 [shape = 'u8[16384]{0}', space=vmem, size = 0x4000, scoped, tag = 'output window, operand 0, single buffered']
    #allocation9 [shape = 'u8[16384]{0}', space=vmem, size = 0x4000, scoped, tag = 'output window, operand 1, single buffered']
    #allocation10 [shape = 's32[1]{0}', space=sflag, size = 0x4, scoped, tag = 'scoped memory for tpu_custom_call.1']
    %10 = vsyncpa [#allocation3], 0
    %11 = vsyncpa [#allocation6], 0
    %12 = vsyncpa [#allocation4], 0
    %13 = vsyncpa [#allocation10], 0
    // Predicated region
    $region2: #{tpu_custom_call.1} parent=1 // pred_check
      _
    $region3: #{tpu_custom_call.1} parent=1 // pred_check_branch
      %15 = sbr.rel (0) target = $region5
    $region4: #{tpu_custom_call.1} parent=1 // pred_region
      %s17 = ssub.s32 512, 512
      %18 = vsyncadd [#allocation3], %s17
      %s19 = sshll.u32 [#allocation2], 4
      %s20 = int_to_ptr.vmem [resolvable:$true] %s19
      %25 = dma.hbm_to_vmem [thread:$0]  %s0, 512, %s20, [#allocation3], 128, 128, 8
    $region5: #{tpu_custom_call.1} parent=1 // pred_fallthru
      _
    // Predicated region
    $region6: #{tpu_custom_call.1} parent=1 // pred_check
      _
    $region7: #{tpu_custom_call.1} parent=1 // pred_check_branch
      %27 = sbr.rel (0) target = $region9
    $region8: #{tpu_custom_call.1} parent=1 // pred_region
      %s29 = ssub.s32 512, 512
      %30 = vsyncadd [#allocation6], %s29
      %s31 = sshll.u32 [#allocation5], 4
      %s32 = int_to_ptr.vmem [resolvable:$true] %s31
      %37 = dma.hbm_to_vmem [thread:$0]  %s1, 512, %s32, [#allocation6], 128, 128, 8
    $region9: #{tpu_custom_call.1} parent=1 // pred_fallthru
      _
    // Predicated region
    $region10: #{tpu_custom_call.1} parent=1 // pred_check
      _
    $region11: #{tpu_custom_call.1} parent=1 // pred_check_branch
      %39 = sbr.rel (0) target = $region13
    $region12: #{tpu_custom_call.1} parent=1 // pred_region
      %s41 = ssub.s32 512, 512
      %42 = vsyncadd [#allocation6], %s41
      %s43 = sshll.u32 [#allocation7], 4
      %s44 = int_to_ptr.vmem [resolvable:$true] %s43
      %49 = dma.hbm_to_vmem [thread:$0]  %s2, 512, %s44, [#allocation6], 128, 128, 8
    $region13: #{tpu_custom_call.1} parent=1 // pred_fallthru
      _
    // Predicated region
    $region14: #{tpu_custom_call.1} parent=1 // pred_check
      _
    $region15: #{tpu_custom_call.1} parent=1 // pred_check_branch
      %51 = sbr.rel (0) target = $region17
    $region16: #{tpu_custom_call.1} parent=1 // pred_region
      %52 = dma.done [#allocation3], 512
    $region17: #{tpu_custom_call.1} parent=1 // pred_fallthru
      _
    // Predicated region
    $region18: #{tpu_custom_call.1} parent=1 // pred_check
      _
    $region19: #{tpu_custom_call.1} parent=1 // pred_check_branch
      %54 = sbr.rel (0) target = $region21
    $region20: #{tpu_custom_call.1} parent=1 // pred_region
      %55 = dma.done [#allocation6], 512
    $region21: #{tpu_custom_call.1} parent=1 // pred_fallthru
      _
    // Predicated region
    $region22: #{tpu_custom_call.1} parent=1 // pred_check
      _
    $region23: #{tpu_custom_call.1} parent=1 // pred_check_branch
      %57 = sbr.rel (0) target = $region25
    $region24: #{tpu_custom_call.1} parent=1 // pred_region
      %58 = dma.done [#allocation6], 512
    $region25: #{tpu_custom_call.1} parent=1 // pred_fallthru
      _
    %v59 = vld [vmem:[#allocation2] sm:$0xff]
    %v60 = vld [vmem:[#allocation2 + $0x8] sm:$0xff]
    %v61 = vld [vmem:[#allocation2 + $0x10] sm:$0xff]
    %v62 = vld [vmem:[#allocation2 + $0x18] sm:$0xff]
    %v63 = vmul.f32 %v59, 0.17677669
    %v64 = vmul.f32 %v60, 0.17677669
    %v65 = vmul.f32 %v61, 0.17677669
    %v66 = vmul.f32 %v62, 0.17677669
    %v67 = vld [vmem:[#allocation5] sm:$0xff]
    %v68 = vld [vmem:[#allocation5 + $0x8] sm:$0xff]
    %v69 = vld [vmem:[#allocation5 + $0x10] sm:$0xff]
    %v70 = vld [vmem:[#allocation5 + $0x18] sm:$0xff]
    %v71 = vld [vmem:[#allocation7] sm:$0xff]
    %v72 = vld [vmem:[#allocation7 + $0x8] sm:$0xff]
    %v73 = vld [vmem:[#allocation7 + $0x10] sm:$0xff]
    %v74 = vld [vmem:[#allocation7 + $0x18] sm:$0xff]
    %vm75 = vcmask 261120
    %v77 = vsel %vm75, %v63, 0
    %v80 = vsel %vm75, %v67, 0
    %82 = vmatprep.subr.mxu0 0.0
    %83 = vmatpush1.xpose.msra.mxu0 0.0
    %84 = vmatprep.subr.mxu0 0.0
    %85 = vmatpush1.xpose.msra.mxu0 0.0
    %86 = vmatprep.subr.mxu0 0.0
    %87 = vmatpush1.xpose.msra.mxu0 0.0
    %88 = vmatprep.subr.mxu0 0.0
    %89 = vmatpush1.xpose.msra.mxu0 0.0
    %90 = vmatprep.subr.mxu0 0.0
    %91 = vmatpush1.xpose.msra.mxu0 0.0
    %92 = vmatprep.subr.mxu0 0.0
    %93 = vmatpush1.xpose.msra.mxu0 0.0
    %94 = vmatprep.subr.mxu0 0.0
    %95 = vmatpush1.xpose.msra.mxu0 0.0
    %96 = vmatprep.subr.mxu0 0.0
    %97 = vmatpush1.xpose.msra.mxu0 0.0
    %98 = vmatprep.subr.mxu0 0.0
    %99 = vmatpush1.xpose.msra.mxu0 0.0
    %100 = vmatprep.subr.mxu0 0.0
    %101 = vmatpush1.xpose.msra.mxu0 0.0
    %102 = vmatprep.subr.mxu0 0.0
    %103 = vmatpush1.xpose.msra.mxu0 0.0
    %104 = vmatprep.subr.mxu0 0.0
    %105 = vmatpush1.xpose.msra.mxu0 0.0
    %106 = vmatprep.subr.mxu0 0.0
    %107 = vmatpush1.xpose.msra.mxu0 0.0
    %108 = vmatprep.subr.mxu0 0.0
    %109 = vmatpush1.xpose.msra.mxu0 0.0
    %110 = vmatprep.subr.mxu0 0.0
    %111 = vmatpush1.xpose.msra.mxu0 0.0
    %112 = vmatprep.subr.mxu0 0.0
    %113 = vmatpush1.xpose.msra.mxu0 %v80
    %114 = vmatprep.subr.mxu0 0.0
    %115 = vmatpush2.xpose.msra.mxu0 0.0
    %116 = vmatprep.subr.mxu0 0.0
    %117 = vmatpush2.xpose.msra.mxu0 0.0
    %118 = vmatprep.subr.mxu0 0.0
    %119 = vmatpush2.xpose.msra.mxu0 0.0
    %120 = vmatprep.subr.mxu0 0.0
    %121 = vmatpush2.xpose.msra.mxu0 0.0
    %122 = vmatprep.subr.mxu0 0.0
    %123 = vmatpush2.xpose.msra.mxu0 0.0
    %124 = vmatprep.subr.mxu0 0.0
    %125 = vmatpush2.xpose.msra.mxu0 0.0
    %126 = vmatprep.subr.mxu0 0.0
    %127 = vmatpush2.xpose.msra.mxu0 0.0
    %128 = vmatprep.subr.mxu0 0.0
    %129 = vmatpush2.xpose.msra.mxu0 0.0
    %130 = vmatprep.subr.mxu0 0.0
    %131 = vmatpush2.xpose.msra.mxu0 0.0
    %132 = vmatprep.subr.mxu0 0.0
    %133 = vmatpush2.xpose.msra.mxu0 0.0
    %134 = vmatprep.subr.mxu0 0.0
    %135 = vmatpush2.xpose.msra.mxu0 0.0
    %136 = vmatprep.subr.mxu0 0.0
    %137 = vmatpush2.xpose.msra.mxu0 0.0
    %138 = vmatprep.subr.mxu0 0.0
    %139 = vmatpush2.xpose.msra.mxu0 0.0
    %140 = vmatprep.subr.mxu0 0.0
    %141 = vmatpush2.xpose.msra.mxu0 0.0
    %142 = vmatprep.subr.mxu0 0.0
    %143 = vmatpush2.xpose.msra.mxu0 0.0
    %144 = vmatprep.subr.mxu0 0.0
    %145 = vmatpush2.xpose.msra.mxu0 0.0
    %146 = vmatprep.mubr.f32.mxu0 0.0
    %147 = vmatmul.mubr.f32.gmra.mxu0 %v77
    %v148 = vpop.f32.mrf.mxu0
    %v149 = vadd.f32 0.0, %v148
    %v150 = vpop.f32.mrf.mxu0
    %151 = vdwg.mxu0
    %v153 = vsel %vm75, %v64, 0
    %v156 = vsel %vm75, %v68, 0
    %158 = vmatprep.subr.mxu0 0.0
    %159 = vmatpush1.xpose.msra.mxu0 0.0
    %160 = vmatprep.subr.mxu0 0.0
    %161 = vmatpush1.xpose.msra.mxu0 0.0
    %162 = vmatprep.subr.mxu0 0.0
    %163 = vmatpush1.xpose.msra.mxu0 0.0
    %164 = vmatprep.subr.mxu0 0.0
    %165 = vmatpush1.xpose.msra.mxu0 0.0
    %166 = vmatprep.subr.mxu0 0.0
    %167 = vmatpush1.xpose.msra.mxu0 0.0
    %168 = vmatprep.subr.mxu0 0.0
    %169 = vmatpush1.xpose.msra.mxu0 0.0
    %170 = vmatprep.subr.mxu0 0.0
    %171 = vmatpush1.xpose.msra.mxu0 0.0
    %172 = vmatprep.subr.mxu0 0.0
    %173 = vmatpush1.xpose.msra.mxu0 0.0
    %174 = vmatprep.subr.mxu0 0.0
    %175 = vmatpush1.xpose.msra.mxu0 0.0
    %176 = vmatprep.subr.mxu0 0.0
    %177 = vmatpush1.xpose.msra.mxu0 0.0
    %178 = vmatprep.subr.mxu0 0.0
    %179 = vmatpush1.xpose.msra.mxu0 0.0
    %180 = vmatprep.subr.mxu0 0.0
    %181 = vmatpush1.xpose.msra.mxu0 0.0
    %182 = vmatprep.subr.mxu0 0.0
    %183 = vmatpush1.xpose.msra.mxu0 0.0
    %184 = vmatprep.subr.mxu0 0.0
    %185 = vmatpush1.xpose.msra.mxu0 0.0
    %186 = vmatprep.subr.mxu0 0.0
    %187 = vmatpush1.xpose.msra.mxu0 0.0
    %188 = vmatprep.subr.mxu0 0.0
    %189 = vmatpush1.xpose.msra.mxu0 %v156
    %190 = vmatprep.subr.mxu0 0.0
    %191 = vmatpush2.xpose.msra.mxu0 0.0
    %192 = vmatprep.subr.mxu0 0.0
    %193 = vmatpush2.xpose.msra.mxu0 0.0
    %194 = vmatprep.subr.mxu0 0.0
    %195 = vmatpush2.xpose.msra.mxu0 0.0
    %196 = vmatprep.subr.mxu0 0.0
    %197 = vmatpush2.xpose.msra.mxu0 0.0
    %198 = vmatprep.subr.mxu0 0.0
    %199 = vmatpush2.xpose.msra.mxu0 0.0
    %200 = vmatprep.subr.mxu0 0.0
    %201 = vmatpush2.xpose.msra.mxu0 0.0
    %202 = vmatprep.subr.mxu0 0.0
    %203 = vmatpush2.xpose.msra.mxu0 0.0
    %204 = vmatprep.subr.mxu0 0.0
    %205 = vmatpush2.xpose.msra.mxu0 0.0
    %206 = vmatprep.subr.mxu0 0.0
    %207 = vmatpush2.xpose.msra.mxu0 0.0
    %208 = vmatprep.subr.mxu0 0.0
    %209 = vmatpush2.xpose.msra.mxu0 0.0
    %210 = vmatprep.subr.mxu0 0.0
    %211 = vmatpush2.xpose.msra.mxu0 0.0
    %212 = vmatprep.subr.mxu0 0.0
    %213 = vmatpush2.xpose.msra.mxu0 0.0
    %214 = vmatprep.subr.mxu0 0.0
    %215 = vmatpush2.xpose.msra.mxu0 0.0
    %216 = vmatprep.subr.mxu0 0.0
    %217 = vmatpush2.xpose.msra.mxu0 0.0
    %218 = vmatprep.subr.mxu0 0.0
    %219 = vmatpush2.xpose.msra.mxu0 0.0
    %220 = vmatprep.subr.mxu0 0.0
    %221 = vmatpush2.xpose.msra.mxu0 0.0
    %222 = vmatprep.mubr.f32.mxu0 0.0
    %223 = vmatmul.mubr.f32.gmra.mxu0 %v153
    %v224 = vpop.f32.mrf.mxu0
    %v225 = vadd.f32 0.0, %v224
    %v226 = vpop.f32.mrf.mxu0
    %227 = vdwg.mxu0
    %v229 = vsel %vm75, %v65, 0
    %v232 = vsel %vm75, %v69, 0
    %234 = vmatprep.subr.mxu0 0.0
    %235 = vmatpush1.xpose.msra.mxu0 0.0
    %236 = vmatprep.subr.mxu0 0.0
    %237 = vmatpush1.xpose.msra.mxu0 0.0
    %238 = vmatprep.subr.mxu0 0.0
    %239 = vmatpush1.xpose.msra.mxu0 0.0
    %240 = vmatprep.subr.mxu0 0.0
    %241 = vmatpush1.xpose.msra.mxu0 0.0
    %242 = vmatprep.subr.mxu0 0.0
    %243 = vmatpush1.xpose.msra.mxu0 0.0
    %244 = vmatprep.subr.mxu0 0.0
    %245 = vmatpush1.xpose.msra.mxu0 0.0
    %246 = vmatprep.subr.mxu0 0.0
    %247 = vmatpush1.xpose.msra.mxu0 0.0
    %248 = vmatprep.subr.mxu0 0.0
    %249 = vmatpush1.xpose.msra.mxu0 0.0
    %250 = vmatprep.subr.mxu0 0.0
    %251 = vmatpush1.xpose.msra.mxu0 0.0
    %252 = vmatprep.subr.mxu0 0.0
    %253 = vmatpush1.xpose.msra.mxu0 0.0
    %254 = vmatprep.subr.mxu0 0.0
    %255 = vmatpush1.xpose.msra.mxu0 0.0
    %256 = vmatprep.subr.mxu0 0.0
    %257 = vmatpush1.xpose.msra.mxu0 0.0
    %258 = vmatprep.subr.mxu0 0.0
    %259 = vmatpush1.xpose.msra.mxu0 0.0
    %260 = vmatprep.subr.mxu0 0.0
    %261 = vmatpush1.xpose.msra.mxu0 0.0
    %262 = vmatprep.subr.mxu0 0.0
    %263 = vmatpush1.xpose.msra.mxu0 0.0
    %264 = vmatprep.subr.mxu0 0.0
    %265 = vmatpush1.xpose.msra.mxu0 %v232
    %266 = vmatprep.subr.mxu0 0.0
    %267 = vmatpush2.xpose.msra.mxu0 0.0
    %268 = vmatprep.subr.mxu0 0.0
    %269 = vmatpush2.xpose.msra.mxu0 0.0
    %270 = vmatprep.subr.mxu0 0.0
    %271 = vmatpush2.xpose.msra.mxu0 0.0
    %272 = vmatprep.subr.mxu0 0.0
    %273 = vmatpush2.xpose.msra.mxu0 0.0
    %274 = vmatprep.subr.mxu0 0.0
    %275 = vmatpush2.xpose.msra.mxu0 0.0
    %276 = vmatprep.subr.mxu0 0.0
    %277 = vmatpush2.xpose.msra.mxu0 0.0
    %278 = vmatprep.subr.mxu0 0.0
    %279 = vmatpush2.xpose.msra.mxu0 0.0
    %280 = vmatprep.subr.mxu0 0.0
    %281 = vmatpush2.xpose.msra.mxu0 0.0
    %282 = vmatprep.subr.mxu0 0.0
    %283 = vmatpush2.xpose.msra.mxu0 0.0
    %284 = vmatprep.subr.mxu0 0.0
    %285 = vmatpush2.xpose.msra.mxu0 0.0
    %286 = vmatprep.subr.mxu0 0.0
    %287 = vmatpush2.xpose.msra.mxu0 0.0
    %288 = vmatprep.subr.mxu0 0.0
    %289 = vmatpush2.xpose.msra.mxu0 0.0
    %290 = vmatprep.subr.mxu0 0.0
    %291 = vmatpush2.xpose.msra.mxu0 0.0
    %292 = vmatprep.subr.mxu0 0.0
    %293 = vmatpush2.xpose.msra.mxu0 0.0
    %294 = vmatprep.subr.mxu0 0.0
    %295 = vmatpush2.xpose.msra.mxu0 0.0
    %296 = vmatprep.subr.mxu0 0.0
    %297 = vmatpush2.xpose.msra.mxu0 0.0
    %298 = vmatprep.mubr.f32.mxu0 0.0
    %299 = vmatmul.mubr.f32.gmra.mxu0 %v229
    %v300 = vpop.f32.mrf.mxu0
    %v301 = vadd.f32 0.0, %v300
    %v302 = vpop.f32.mrf.mxu0
    %303 = vdwg.mxu0
    %v305 = vsel %vm75, %v66, 0
    %v308 = vsel %vm75, %v70, 0
    %310 = vmatprep.subr.mxu0 0.0
    %311 = vmatpush1.xpose.msra.mxu0 0.0
    %312 = vmatprep.subr.mxu0 0.0
    %313 = vmatpush1.xpose.msra.mxu0 0.0
    %314 = vmatprep.subr.mxu0 0.0
    %315 = vmatpush1.xpose.msra.mxu0 0.0
    %316 = vmatprep.subr.mxu0 0.0
    %317 = vmatpush1.xpose.msra.mxu0 0.0
    %318 = vmatprep.subr.mxu0 0.0
    %319 = vmatpush1.xpose.msra.mxu0 0.0
    %320 = vmatprep.subr.mxu0 0.0
    %321 = vmatpush1.xpose.msra.mxu0 0.0
    %322 = vmatprep.subr.mxu0 0.0
    %323 = vmatpush1.xpose.msra.mxu0 0.0
    %324 = vmatprep.subr.mxu0 0.0
    %325 = vmatpush1.xpose.msra.mxu0 0.0
    %326 = vmatprep.subr.mxu0 0.0
    %327 = vmatpush1.xpose.msra.mxu0 0.0
    %328 = vmatprep.subr.mxu0 0.0
    %329 = vmatpush1.xpose.msra.mxu0 0.0
    %330 = vmatprep.subr.mxu0 0.0
    %331 = vmatpush1.xpose.msra.mxu0 0.0
    %332 = vmatprep.subr.mxu0 0.0
    %333 = vmatpush1.xpose.msra.mxu0 0.0
    %334 = vmatprep.subr.mxu0 0.0
    %335 = vmatpush1.xpose.msra.mxu0 0.0
    %336 = vmatprep.subr.mxu0 0.0
    %337 = vmatpush1.xpose.msra.mxu0 0.0
    %338 = vmatprep.subr.mxu0 0.0
    %339 = vmatpush1.xpose.msra.mxu0 0.0
    %340 = vmatprep.subr.mxu0 0.0
    %341 = vmatpush1.xpose.msra.mxu0 %v308
    %342 = vmatprep.subr.mxu0 0.0
    %343 = vmatpush2.xpose.msra.mxu0 0.0
    %344 = vmatprep.subr.mxu0 0.0
    %345 = vmatpush2.xpose.msra.mxu0 0.0
    %346 = vmatprep.subr.mxu0 0.0
    %347 = vmatpush2.xpose.msra.mxu0 0.0
    %348 = vmatprep.subr.mxu0 0.0
    %349 = vmatpush2.xpose.msra.mxu0 0.0
    %350 = vmatprep.subr.mxu0 0.0
    %351 = vmatpush2.xpose.msra.mxu0 0.0
    %352 = vmatprep.subr.mxu0 0.0
    %353 = vmatpush2.xpose.msra.mxu0 0.0
    %354 = vmatprep.subr.mxu0 0.0
    %355 = vmatpush2.xpose.msra.mxu0 0.0
    %356 = vmatprep.subr.mxu0 0.0
    %357 = vmatpush2.xpose.msra.mxu0 0.0
    %358 = vmatprep.subr.mxu0 0.0
    %359 = vmatpush2.xpose.msra.mxu0 0.0
    %360 = vmatprep.subr.mxu0 0.0
    %361 = vmatpush2.xpose.msra.mxu0 0.0
    %362 = vmatprep.subr.mxu0 0.0
    %363 = vmatpush2.xpose.msra.mxu0 0.0
    %364 = vmatprep.subr.mxu0 0.0
    %365 = vmatpush2.xpose.msra.mxu0 0.0
    %366 = vmatprep.subr.mxu0 0.0
    %367 = vmatpush2.xpose.msra.mxu0 0.0
    %368 = vmatprep.subr.mxu0 0.0
    %369 = vmatpush2.xpose.msra.mxu0 0.0
    %370 = vmatprep.subr.mxu0 0.0
    %371 = vmatpush2.xpose.msra.mxu0 0.0
    %372 = vmatprep.subr.mxu0 0.0
    %373 = vmatpush2.xpose.msra.mxu0 0.0
    %374 = vmatprep.mubr.f32.mxu0 0.0
    %375 = vmatmul.mubr.f32.gmra.mxu0 %v305
    %v376 = vpop.f32.mrf.mxu0
    %v377 = vadd.f32 0.0, %v376
    %v378 = vpop.f32.mrf.mxu0
    %379 = vdwg.mxu0
    %vm380 = vcmask 64512
    %v381 = vsel %vm380, %v149, -inf
    %382 = vmax.xlane.f32.xlu0 %v381
    %v383 = vpop.xlane.xlu0 %382
    %v384 = vsel %vm380, %v225, -inf
    %385 = vmax.xlane.f32.xlu0 %v384
    %v386 = vpop.xlane.xlu0 %385
    %v387 = vsel %vm380, %v301, -inf
    %388 = vmax.xlane.f32.xlu0 %v387
    %v389 = vpop.xlane.xlu0 %388
    %v390 = vsel %vm380, %v377, -inf
    %391 = vmax.xlane.f32.xlu0 %v390
    %v392 = vpop.xlane.xlu0 %391
    %v393 = vsub.f32 %v149, %v383
    %v394 = vsub.f32 %v225, %v386
    %v395 = vsub.f32 %v301, %v389
    %v396 = vsub.f32 %v377, %v392
    %v397 = vmul.f32 %v393, 1.442695
    %v398 = vpow.pop %v397
    %v399 = vmul.f32 %v394, 1.442695
    %v400 = vpow.pop %v399
    %v401 = vmul.f32 %v395, 1.442695
    %v402 = vpow.pop %v401
    %v403 = vmul.f32 %v396, 1.442695
    %v404 = vpow.pop %v403
    %v405 = vsel %vm380, %v398, 0.0
    %406 = vadd.xlane.f32.xlu0 %v405
    %v407 = vpop.xlane.xlu0 %406
    %v408 = vsel %vm380, %v400, 0.0
    %409 = vadd.xlane.f32.xlu0 %v408
    %v410 = vpop.xlane.xlu0 %409
    %v411 = vsel %vm380, %v402, 0.0
    %412 = vadd.xlane.f32.xlu0 %v411
    %v413 = vpop.xlane.xlu0 %412
    %v414 = vsel %vm380, %v404, 0.0
    %415 = vadd.xlane.f32.xlu0 %v414
    %v416 = vpop.xlane.xlu0 %415
    %v417 = vrcp.pop %v407
    %v418 = vrcp.pop %v410
    %v419 = vrcp.pop %v413
    %v420 = vrcp.pop %v416
    %v421 = vmul.f32 %v398, %v417
    %v422 = vmul.f32 %v400, %v418
    %v423 = vmul.f32 %v402, %v419
    %v424 = vmul.f32 %v404, %v420
    %425 = vst.msk [vmem:[#allocation9] sm:$0xff] %vm380, %v421
    %426 = vst.msk [vmem:[#allocation9 + $0x8] sm:$0xff] %vm380, %v422
    %427 = vst.msk [vmem:[#allocation9 + $0x10] sm:$0xff] %vm380, %v423
    %428 = vst.msk [vmem:[#allocation9 + $0x18] sm:$0xff] %vm380, %v424
    %v430 = vsel %vm380, %v421, 0
    %432 = vmatprep.subr.mxu0 0.0
    %433 = vmatpush1.msra.mxu0 0.0
    %434 = vmatprep.subr.mxu0 0.0
    %435 = vmatpush1.msra.mxu0 0.0
    %436 = vmatprep.subr.mxu0 0.0
    %437 = vmatpush1.msra.mxu0 0.0
    %438 = vmatprep.subr.mxu0 0.0
    %439 = vmatpush1.msra.mxu0 0.0
    %440 = vmatprep.subr.mxu0 0.0
    %441 = vmatpush1.msra.mxu0 0.0
    %442 = vmatprep.subr.mxu0 0.0
    %443 = vmatpush1.msra.mxu0 0.0
    %444 = vmatprep.subr.mxu0 0.0
    %445 = vmatpush1.msra.mxu0 0.0
    %446 = vmatprep.subr.mxu0 0.0
    %447 = vmatpush1.msra.mxu0 0.0
    %448 = vmatprep.subr.mxu0 0.0
    %449 = vmatpush1.msra.mxu0 0.0
    %450 = vmatprep.subr.mxu0 0.0
    %451 = vmatpush1.msra.mxu0 0.0
    %452 = vmatprep.subr.mxu0 0.0
    %453 = vmatpush1.msra.mxu0 0.0
    %454 = vmatprep.subr.mxu0 0.0
    %455 = vmatpush1.msra.mxu0 0.0
    %456 = vmatprep.subr.mxu0 0.0
    %457 = vmatpush1.msra.mxu0 0.0
    %458 = vmatprep.subr.mxu0 0.0
    %459 = vmatpush1.msra.mxu0 0.0
    %460 = vmatprep.subr.mxu0 0.0
    %461 = vmatpush1.msra.mxu0 0.0
    %462 = vmatprep.subr.mxu0 0.0
    %463 = vmatpush1.msra.mxu0 %v71
    %464 = vmatprep.subr.mxu0 0.0
    %465 = vmatpush2.msra.mxu0 0.0
    %466 = vmatprep.subr.mxu0 0.0
    %467 = vmatpush2.msra.mxu0 0.0
    %468 = vmatprep.subr.mxu0 0.0
    %469 = vmatpush2.msra.mxu0 0.0
    %470 = vmatprep.subr.mxu0 0.0
    %471 = vmatpush2.msra.mxu0 0.0
    %472 = vmatprep.subr.mxu0 0.0
    %473 = vmatpush2.msra.mxu0 0.0
    %474 = vmatprep.subr.mxu0 0.0
    %475 = vmatpush2.msra.mxu0 0.0
    %476 = vmatprep.subr.mxu0 0.0
    %477 = vmatpush2.msra.mxu0 0.0
    %478 = vmatprep.subr.mxu0 0.0
    %479 = vmatpush2.msra.mxu0 0.0
    %480 = vmatprep.subr.mxu0 0.0
    %481 = vmatpush2.msra.mxu0 0.0
    %482 = vmatprep.subr.mxu0 0.0
    %483 = vmatpush2.msra.mxu0 0.0
    %484 = vmatprep.subr.mxu0 0.0
    %485 = vmatpush2.msra.mxu0 0.0
    %486 = vmatprep.subr.mxu0 0.0
    %487 = vmatpush2.msra.mxu0 0.0
    %488 = vmatprep.subr.mxu0 0.0
    %489 = vmatpush2.msra.mxu0 0.0
    %490 = vmatprep.subr.mxu0 0.0
    %491 = vmatpush2.msra.mxu0 0.0
    %492 = vmatprep.subr.mxu0 0.0
    %493 = vmatpush2.msra.mxu0 0.0
    %494 = vmatprep.subr.mxu0 0.0
    %495 = vmatpush2.msra.mxu0 0.0
    %496 = vmatprep.mubr.f32.mxu0 0.0
    %497 = vmatmul.mubr.f32.gmra.mxu0 %v430
    %v498 = vpop.f32.mrf.mxu0
    %v499 = vadd.f32 0.0, %v498
    %v500 = vpop.f32.mrf.mxu0
    %501 = vdwg.mxu0
    %v503 = vsel %vm380, %v422, 0
    %505 = vmatprep.subr.mxu0 0.0
    %506 = vmatpush1.msra.mxu0 0.0
    %507 = vmatprep.subr.mxu0 0.0
    %508 = vmatpush1.msra.mxu0 0.0
    %509 = vmatprep.subr.mxu0 0.0
    %510 = vmatpush1.msra.mxu0 0.0
    %511 = vmatprep.subr.mxu0 0.0
    %512 = vmatpush1.msra.mxu0 0.0
    %513 = vmatprep.subr.mxu0 0.0
    %514 = vmatpush1.msra.mxu0 0.0
    %515 = vmatprep.subr.mxu0 0.0
    %516 = vmatpush1.msra.mxu0 0.0
    %517 = vmatprep.subr.mxu0 0.0
    %518 = vmatpush1.msra.mxu0 0.0
    %519 = vmatprep.subr.mxu0 0.0
    %520 = vmatpush1.msra.mxu0 0.0
    %521 = vmatprep.subr.mxu0 0.0
    %522 = vmatpush1.msra.mxu0 0.0
    %523 = vmatprep.subr.mxu0 0.0
    %524 = vmatpush1.msra.mxu0 0.0
    %525 = vmatprep.subr.mxu0 0.0
    %526 = vmatpush1.msra.mxu0 0.0
    %527 = vmatprep.subr.mxu0 0.0
    %528 = vmatpush1.msra.mxu0 0.0
    %529 = vmatprep.subr.mxu0 0.0
    %530 = vmatpush1.msra.mxu0 0.0
    %531 = vmatprep.subr.mxu0 0.0
    %532 = vmatpush1.msra.mxu0 0.0
    %533 = vmatprep.subr.mxu0 0.0
    %534 = vmatpush1.msra.mxu0 0.0
    %535 = vmatprep.subr.mxu0 0.0
    %536 = vmatpush1.msra.mxu0 %v72
    %537 = vmatprep.subr.mxu0 0.0
    %538 = vmatpush2.msra.mxu0 0.0
    %539 = vmatprep.subr.mxu0 0.0
    %540 = vmatpush2.msra.mxu0 0.0
    %541 = vmatprep.subr.mxu0 0.0
    %542 = vmatpush2.msra.mxu0 0.0
    %543 = vmatprep.subr.mxu0 0.0
    %544 = vmatpush2.msra.mxu0 0.0
    %545 = vmatprep.subr.mxu0 0.0
    %546 = vmatpush2.msra.mxu0 0.0
    %547 = vmatprep.subr.mxu0 0.0
    %548 = vmatpush2.msra.mxu0 0.0
    %549 = vmatprep.subr.mxu0 0.0
    %550 = vmatpush2.msra.mxu0 0.0
    %551 = vmatprep.subr.mxu0 0.0
    %552 = vmatpush2.msra.mxu0 0.0
    %553 = vmatprep.subr.mxu0 0.0
    %554 = vmatpush2.msra.mxu0 0.0
    %555 = vmatprep.subr.mxu0 0.0
    %556 = vmatpush2.msra.mxu0 0.0
    %557 = vmatprep.subr.mxu0 0.0
    %558 = vmatpush2.msra.mxu0 0.0
    %559 = vmatprep.subr.mxu0 0.0
    %560 = vmatpush2.msra.mxu0 0.0
    %561 = vmatprep.subr.mxu0 0.0
    %562 = vmatpush2.msra.mxu0 0.0
    %563 = vmatprep.subr.mxu0 0.0
    %564 = vmatpush2.msra.mxu0 0.0
    %565 = vmatprep.subr.mxu0 0.0
    %566 = vmatpush2.msra.mxu0 0.0
    %567 = vmatprep.subr.mxu0 0.0
    %568 = vmatpush2.msra.mxu0 0.0
    %569 = vmatprep.mubr.f32.mxu0 0.0
    %570 = vmatmul.mubr.f32.gmra.mxu0 %v503
    %v571 = vpop.f32.mrf.mxu0
    %v572 = vadd.f32 0.0, %v571
    %v573 = vpop.f32.mrf.mxu0
    %574 = vdwg.mxu0
    %v576 = vsel %vm380, %v423, 0
    %578 = vmatprep.subr.mxu0 0.0
    %579 = vmatpush1.msra.mxu0 0.0
    %580 = vmatprep.subr.mxu0 0.0
    %581 = vmatpush1.msra.mxu0 0.0
    %582 = vmatprep.subr.mxu0 0.0
    %583 = vmatpush1.msra.mxu0 0.0
    %584 = vmatprep.subr.mxu0 0.0
    %585 = vmatpush1.msra.mxu0 0.0
    %586 = vmatprep.subr.mxu0 0.0
    %587 = vmatpush1.msra.mxu0 0.0
    %588 = vmatprep.subr.mxu0 0.0
    %589 = vmatpush1.msra.mxu0 0.0
    %590 = vmatprep.subr.mxu0 0.0
    %591 = vmatpush1.msra.mxu0 0.0
    %592 = vmatprep.subr.mxu0 0.0
    %593 = vmatpush1.msra.mxu0 0.0
    %594 = vmatprep.subr.mxu0 0.0
    %595 = vmatpush1.msra.mxu0 0.0
    %596 = vmatprep.subr.mxu0 0.0
    %597 = vmatpush1.msra.mxu0 0.0
    %598 = vmatprep.subr.mxu0 0.0
    %599 = vmatpush1.msra.mxu0 0.0
    %600 = vmatprep.subr.mxu0 0.0
    %601 = vmatpush1.msra.mxu0 0.0
    %602 = vmatprep.subr.mxu0 0.0
    %603 = vmatpush1.msra.mxu0 0.0
    %604 = vmatprep.subr.mxu0 0.0
    %605 = vmatpush1.msra.mxu0 0.0
    %606 = vmatprep.subr.mxu0 0.0
    %607 = vmatpush1.msra.mxu0 0.0
    %608 = vmatprep.subr.mxu0 0.0
    %609 = vmatpush1.msra.mxu0 %v73
    %610 = vmatprep.subr.mxu0 0.0
    %611 = vmatpush2.msra.mxu0 0.0
    %612 = vmatprep.subr.mxu0 0.0
    %613 = vmatpush2.msra.mxu0 0.0
    %614 = vmatprep.subr.mxu0 0.0
    %615 = vmatpush2.msra.mxu0 0.0
    %616 = vmatprep.subr.mxu0 0.0
    %617 = vmatpush2.msra.mxu0 0.0
    %618 = vmatprep.subr.mxu0 0.0
    %619 = vmatpush2.msra.mxu0 0.0
    %620 = vmatprep.subr.mxu0 0.0
    %621 = vmatpush2.msra.mxu0 0.0
    %622 = vmatprep.subr.mxu0 0.0
    %623 = vmatpush2.msra.mxu0 0.0
    %624 = vmatprep.subr.mxu0 0.0
    %625 = vmatpush2.msra.mxu0 0.0
    %626 = vmatprep.subr.mxu0 0.0
    %627 = vmatpush2.msra.mxu0 0.0
    %628 = vmatprep.subr.mxu0 0.0
    %629 = vmatpush2.msra.mxu0 0.0
    %630 = vmatprep.subr.mxu0 0.0
    %631 = vmatpush2.msra.mxu0 0.0
    %632 = vmatprep.subr.mxu0 0.0
    %633 = vmatpush2.msra.mxu0 0.0
    %634 = vmatprep.subr.mxu0 0.0
    %635 = vmatpush2.msra.mxu0 0.0
    %636 = vmatprep.subr.mxu0 0.0
    %637 = vmatpush2.msra.mxu0 0.0
    %638 = vmatprep.subr.mxu0 0.0
    %639 = vmatpush2.msra.mxu0 0.0
    %640 = vmatprep.subr.mxu0 0.0
    %641 = vmatpush2.msra.mxu0 0.0
    %642 = vmatprep.mubr.f32.mxu0 0.0
    %643 = vmatmul.mubr.f32.gmra.mxu0 %v576
    %v644 = vpop.f32.mrf.mxu0
    %v645 = vadd.f32 0.0, %v644
    %v646 = vpop.f32.mrf.mxu0
    %647 = vdwg.mxu0
    %v649 = vsel %vm380, %v424, 0
    %651 = vmatprep.subr.mxu0 0.0
    %652 = vmatpush1.msra.mxu0 0.0
    %653 = vmatprep.subr.mxu0 0.0
    %654 = vmatpush1.msra.mxu0 0.0
    %655 = vmatprep.subr.mxu0 0.0
    %656 = vmatpush1.msra.mxu0 0.0
    %657 = vmatprep.subr.mxu0 0.0
    %658 = vmatpush1.msra.mxu0 0.0
    %659 = vmatprep.subr.mxu0 0.0
    %660 = vmatpush1.msra.mxu0 0.0
    %661 = vmatprep.subr.mxu0 0.0
    %662 = vmatpush1.msra.mxu0 0.0
    %663 = vmatprep.subr.mxu0 0.0
    %664 = vmatpush1.msra.mxu0 0.0
    %665 = vmatprep.subr.mxu0 0.0
    %666 = vmatpush1.msra.mxu0 0.0
    %667 = vmatprep.subr.mxu0 0.0
    %668 = vmatpush1.msra.mxu0 0.0
    %669 = vmatprep.subr.mxu0 0.0
    %670 = vmatpush1.msra.mxu0 0.0
    %671 = vmatprep.subr.mxu0 0.0
    %672 = vmatpush1.msra.mxu0 0.0
    %673 = vmatprep.subr.mxu0 0.0
    %674 = vmatpush1.msra.mxu0 0.0
    %675 = vmatprep.subr.mxu0 0.0
    %676 = vmatpush1.msra.mxu0 0.0
    %677 = vmatprep.subr.mxu0 0.0
    %678 = vmatpush1.msra.mxu0 0.0
    %679 = vmatprep.subr.mxu0 0.0
    %680 = vmatpush1.msra.mxu0 0.0
    %681 = vmatprep.subr.mxu0 0.0
    %682 = vmatpush1.msra.mxu0 %v74
    %683 = vmatprep.subr.mxu0 0.0
    %684 = vmatpush2.msra.mxu0 0.0
    %685 = vmatprep.subr.mxu0 0.0
    %686 = vmatpush2.msra.mxu0 0.0
    %687 = vmatprep.subr.mxu0 0.0
    %688 = vmatpush2.msra.mxu0 0.0
    %689 = vmatprep.subr.mxu0 0.0
    %690 = vmatpush2.msra.mxu0 0.0
    %691 = vmatprep.subr.mxu0 0.0
    %692 = vmatpush2.msra.mxu0 0.0
    %693 = vmatprep.subr.mxu0 0.0
    %694 = vmatpush2.msra.mxu0 0.0
    %695 = vmatprep.subr.mxu0 0.0
    %696 = vmatpush2.msra.mxu0 0.0
    %697 = vmatprep.subr.mxu0 0.0
    %698 = vmatpush2.msra.mxu0 0.0
    %699 = vmatprep.subr.mxu0 0.0
    %700 = vmatpush2.msra.mxu0 0.0
    %701 = vmatprep.subr.mxu0 0.0
    %702 = vmatpush2.msra.mxu0 0.0
    %703 = vmatprep.subr.mxu0 0.0
    %704 = vmatpush2.msra.mxu0 0.0
    %705 = vmatprep.subr.mxu0 0.0
    %706 = vmatpush2.msra.mxu0 0.0
    %707 = vmatprep.subr.mxu0 0.0
    %708 = vmatpush2.msra.mxu0 0.0
    %709 = vmatprep.subr.mxu0 0.0
    %710 = vmatpush2.msra.mxu0 0.0
    %711 = vmatprep.subr.mxu0 0.0
    %712 = vmatpush2.msra.mxu0 0.0
    %713 = vmatprep.subr.mxu0 0.0
    %714 = vmatpush2.msra.mxu0 0.0
    %715 = vmatprep.mubr.f32.mxu0 0.0
    %716 = vmatmul.mubr.f32.gmra.mxu0 %v649
    %v717 = vpop.f32.mrf.mxu0
    %v718 = vadd.f32 0.0, %v717
    %v719 = vpop.f32.mrf.mxu0
    %720 = vdwg.mxu0
    %721 = vst.msk [vmem:[#allocation8] sm:$0xff] %vm75, %v499
    %722 = vst.msk [vmem:[#allocation8 + $0x8] sm:$0xff] %vm75, %v572
    %723 = vst.msk [vmem:[#allocation8 + $0x10] sm:$0xff] %vm75, %v645
    %724 = vst.msk [vmem:[#allocation8 + $0x18] sm:$0xff] %vm75, %v718
    // Predicated region
    $region26: #{tpu_custom_call.1} parent=1 // pred_check
      _
    $region27: #{tpu_custom_call.1} parent=1 // pred_check_branch
      %726 = sbr.rel (0) target = $region29
    $region28: #{tpu_custom_call.1} parent=1 // pred_region
      %s728 = ssub.s32 512, 512
      %729 = vsyncadd [#allocation4], %s728
      %s730 = sshll.u32 [#allocation8], 4
      %s731 = int_to_ptr.vmem [resolvable:$true] %s730
      %736 = dma.vmem_to_hbm [thread:$0]  %s731, 512, %s3, [#allocation4], 128, 128, 8
    $region29: #{tpu_custom_call.1} parent=1 // pred_fallthru
      _
    // Predicated region
    $region30: #{tpu_custom_call.1} parent=1 // pred_check
      _
    $region31: #{tpu_custom_call.1} parent=1 // pred_check_branch
      %738 = sbr.rel (0) target = $region33
    $region32: #{tpu_custom_call.1} parent=1 // pred_region
      %s740 = ssub.s32 512, 512
      %741 = vsyncadd [#allocation10], %s740
      %s742 = sshll.u32 [#allocation9], 4
      %s743 = int_to_ptr.vmem [resolvable:$true] %s742
      %748 = dma.vmem_to_hbm [thread:$0]  %s743, 512, %s4, [#allocation10], 128, 128, 8
    $region33: #{tpu_custom_call.1} parent=1 // pred_fallthru
      _
    // Predicated region
    $region34: #{tpu_custom_call.1} parent=1 // pred_check
      _
    $region35: #{tpu_custom_call.1} parent=1 // pred_check_branch
      %750 = sbr.rel (0) target = $region37
    $region36: #{tpu_custom_call.1} parent=1 // pred_region
      %751 = dma.done [#allocation4], 512
    $region37: #{tpu_custom_call.1} parent=1 // pred_fallthru
      _
    // Predicated region
    $region38: #{tpu_custom_call.1} parent=1 // pred_check
      _
    $region39: #{tpu_custom_call.1} parent=1 // pred_check_branch
      %753 = sbr.rel (0) target = $region41
    $region40: #{tpu_custom_call.1} parent=1 // pred_region
      %754 = dma.done [#allocation10], 512
    $region41: #{tpu_custom_call.1} parent=1 // pred_fallthru
      _
    %755 = vsyncpa [#allocation3], 1
    %756 = vsyncpa [#allocation6], 1
    %757 = vsyncpa [#allocation4], 1
    %758 = vsyncpa [#allocation10], 1

</llo_original>
